<compile_context>
chip_gen: v6e
topology: v6e:2x2x1
jax: 0.10.0
libtpu: 0.0.40
codegen_flags: <defaults>
</compile_context>

<pallas_src>
import jax
import jax.numpy as jnp
from jax.experimental import pallas as pl
from jax.experimental.pallas import tpu as pltpu

# Model hyper-parameters (small, consistent with the module's __init__).
IN_DIM = 16
DIM_ENC = 32
DIM_OUT = 16
N_RES = 2
NORM = True
LN_EPS = 1e-5       # torch.nn.LayerNorm default
PACK = 8            # rows packed per 128-lane row (8 * IN_DIM = 128 lanes)


def encoder_kernel(x_ref, w_in_ref, w_res2_ref, m_ref, w_out_ref, vecs_ref, o_ref):
    """Full forward pass for one (packed_rows, lanes) tile, all in VMEM.

    Lane layout: each packed row holds PACK independent logical rows; every
    weight is block-diagonal, so matmuls / LayerNorm never mix logical rows.
    """
    pd = w_in_ref.shape[1]    # PACK * DIM_ENC   (256)
    po = w_out_ref.shape[1]   # PACK * DIM_OUT   (128)

    # Hoisted parameter loads (reused across the unrolled N_RES loop).
    w_in = w_in_ref[...]
    w_res2 = w_res2_ref[...]
    m_bd = m_ref[...]
    w_out = w_out_ref[...]
    b_in = vecs_ref[0:1, :pd]
    b_res2 = vecs_ref[1:2, :]
    gamma = vecs_ref[2:3, :pd]
    beta = vecs_ref[3:4, :pd]
    b_out = vecs_ref[4:5, :po]

    # Input projection (bf16 x bf16 -> f32 accumulation).
    h = jnp.dot(x_ref[...], w_in, preferred_element_type=jnp.float32) + b_in

    # Residual stack; parameters shared across all N_RES iterations, matching
    # ModuleList([Linear_ResBlock(...)] * n_res_layers) semantics.
    for _ in range(N_RES):
        h16 = h.astype(jnp.bfloat16)
        # One dot gives [y | mu]: mu is the per-group mean of y, already
        # broadcast across each group's 32 lanes (folded via W_bd @ M).
        z = jnp.dot(h16, w_res2, preferred_element_type=jnp.float32) + b_res2
        y = z[:, :pd]
        if NORM:
            mu = z[:, pd:]
            d = y - mu
            # Per-group variance, broadcast within the group (MXU, 256-wide).
            var = jnp.dot((d * d).astype(jnp.bfloat16), m_bd,
                          preferred_element_type=jnp.float32)
            inv = jax.lax.rsqrt(var + LN_EPS)          # EUP
            y = d * inv * gamma + beta
        h = h + jnp.maximum(y, 0.0)                    # identity + ReLU(...)

    # Output projection.
    o = jnp.dot(h.astype(jnp.bfloat16), w_out,
                preferred_element_type=jnp.float32) + b_out
    o_ref[...] = o.astype(o_ref.dtype)


def encoder_forward(x, params, row_block=4096, pack=PACK):
    b, s, in_dim = x.shape
    assert in_dim == IN_DIM
    rows = b * s
    P = pack

    w_in, b_in, w_res, b_res, gamma, beta, w_out, b_out = params

    # ---- trace-time packed / block-diagonal parameters ----------------------
    eye = jnp.eye(P, dtype=jnp.float32)
    mean_blk = jnp.full((DIM_ENC, DIM_ENC), 1.0 / DIM_ENC, jnp.float32)
    w_in_bd = jnp.kron(eye, w_in)                       # (P*IN,  P*ENC)
    w_res_bd = jnp.kron(eye, w_res)                     # (P*ENC, P*ENC)
    w_out_bd = jnp.kron(eye, w_out)                     # (P*ENC, P*OUT)
    m_bd = jnp.kron(eye, mean_blk)                      # per-group mean matrix
    w_res2 = jnp.concatenate([w_res_bd, w_res_bd @ m_bd], axis=1)   # (P*ENC, 2*P*ENC)

    b_in_t = jnp.tile(b_in, (1, P))
    b_res_t = jnp.tile(b_res, (1, P))
    gamma_t = jnp.tile(gamma, (1, P))
    beta_t = jnp.tile(beta, (1, P))
    b_out_t = jnp.tile(b_out, (1, P))
    b_res2 = jnp.concatenate([b_res_t, b_res_t @ m_bd], axis=1)     # (1, 2*P*ENC)

    pd, po, w2 = P * DIM_ENC, P * DIM_OUT, 2 * P * DIM_ENC

    def pad_to(v, width):
        return jnp.pad(v, ((0, 0), (0, width - v.shape[1])))

    # Pack the small per-feature vectors into one array -> fewer BlockSpecs/DMAs.
    vecs = jnp.concatenate(
        [pad_to(b_in_t, w2), b_res2, pad_to(gamma_t, w2),
         pad_to(beta_t, w2), pad_to(b_out_t, w2)], axis=0)          # (5, w2) f32

    # ---- pack rows into lanes: (rows, 16) -> (rows/P, P*16) -----------------
    rows_p = ((rows + P - 1) // P) * P      # pad by at most P-1 rows (cheap)
    x2 = x.reshape(rows, IN_DIM)
    if rows_p != rows:
        x2 = jnp.pad(x2, ((0, rows_p - rows), (0, 0)))
    rows8 = rows_p // P
    xp = x2.reshape(rows8, P * IN_DIM).astype(jnp.bfloat16)

    # Packed-row tile size (multiple of 8 sublanes unless it spans the whole array).
    rb8_target = max(8, (row_block // (8 * P)) * 8)
    if rows8 <= rb8_target:
        rb8, grid = rows8, 1
    else:
        rb8 = rb8_target
        grid = (rows8 + rb8 - 1) // rb8     # partial edge block masked by Pallas

    out = pl.pallas_call(
        encoder_kernel,
        out_shape=jax.ShapeDtypeStruct((rows8, po), jnp.float32),
        grid_spec=pltpu.PrefetchScalarGridSpec(
            num_scalar_prefetch=0,
            grid=(grid,),
            in_specs=[
                pl.BlockSpec((rb8, P * IN_DIM), lambda i: (i, 0)),   # x tile
                pl.BlockSpec((P * IN_DIM, pd), lambda i: (0, 0)),    # w_in  (block-diag)
                pl.BlockSpec((pd, w2), lambda i: (0, 0)),            # [w_res | w_res@M]
                pl.BlockSpec((pd, pd), lambda i: (0, 0)),            # mean matrix M
                pl.BlockSpec((pd, po), lambda i: (0, 0)),            # w_out (block-diag)
                pl.BlockSpec((5, w2), lambda i: (0, 0)),             # packed biases/affine
            ],
            out_specs=pl.BlockSpec((rb8, po), lambda i: (i, 0)),
        ),
        compiler_params=pltpu.CompilerParams(
            dimension_semantics=("parallel",),
            vmem_limit_bytes=32 * 1024 * 1024,
        ),
    )(xp,
      w_in_bd.astype(jnp.bfloat16),
      w_res2.astype(jnp.bfloat16),
      m_bd.astype(jnp.bfloat16),
      w_out_bd.astype(jnp.bfloat16),
      vecs)

    out = out.reshape(rows_p, DIM_OUT)
    if rows_p != rows:
        out = out[:rows]
    return out.reshape(b, s, DIM_OUT)


def init_params(key):
    """Deterministic torch-Linear-style init: U(-1/sqrt(fan_in), 1/sqrt(fan_in))."""
    ks = jax.random.split(key, 6)

    def lin(kw, kb, fan_in, fan_out):
        bound = 1.0 / jnp.sqrt(fan_in)
        w = jax.random.uniform(kw, (fan_in, fan_out), jnp.float32, -bound, bound)
        b = jax.random.uniform(kb, (1, fan_out), jnp.float32, -bound, bound)
        return w, b

    w_in, b_in = lin(ks[0], ks[1], IN_DIM, DIM_ENC)
    w_res, b_res = lin(ks[2], ks[3], DIM_ENC, DIM_ENC)
    gamma = jnp.ones((1, DIM_ENC), jnp.float32)   # LayerNorm weight
    beta = jnp.zeros((1, DIM_ENC), jnp.float32)   # LayerNorm bias
    w_out, b_out = lin(ks[4], ks[5], DIM_ENC, DIM_OUT)
    return (w_in, b_in, w_res, b_res, gamma, beta, w_out, b_out)


def reference_forward(x, params):
    """Pure-JAX f32 reference mirroring the PyTorch forward (two-pass LayerNorm)."""
    w_in, b_in, w_res, b_res, gamma, beta, w_out, b_out = params
    h = x @ w_in + b_in
    for _ in range(N_RES):
        y = h @ w_res + b_res
        if NORM:
            mu = jnp.mean(y, axis=-1, keepdims=True)
            var = jnp.mean((y - mu) ** 2, axis=-1, keepdims=True)
            y = (y - mu) / jnp.sqrt(var + LN_EPS) * gamma + beta
        h = h + jax.nn.relu(y)
    return h @ w_out + b_out


if __name__ == "__main__":
    key = jax.random.PRNGKey(0)
    k_x, k_x2, k_x3, k_p = jax.random.split(key, 4)

    params = init_params(k_p)

    # Kernel runs bf16 on the MXU (f32 accumulation); reference is pure f32.
    TOL = dict(atol=5e-2, rtol=5e-2)

    # Small shape consistent with the module (batch=2, seq=8, in_dim=16).
    batch, seq = 2, 8
    x = jax.random.normal(k_x, (batch, seq, IN_DIM), jnp.float32)
    out = jax.block_until_ready(encoder_forward(x, params))
    ref = reference_forward(x, params)
    assert out.shape == (batch, seq, DIM_OUT)
    assert bool(jnp.all(jnp.isfinite(out)))
    assert jnp.allclose(out, ref, **TOL), "mismatch vs reference (small)"

    # Ragged row count: exercises the pad-to-multiple-of-PACK path.
    xb = jax.random.normal(k_x2, (3, 7, IN_DIM), jnp.float32)
    outb = jax.block_until_ready(encoder_forward(xb, params))
    refb = reference_forward(xb, params)
    assert outb.shape == (3, 7, DIM_OUT)
    assert jnp.allclose(outb, refb, **TOL), "mismatch vs reference (ragged)"

    # Multi-block grid (row_block override so grid > 1 with exact division).
    xc = jax.random.normal(k_x3, (4, 32, IN_DIM), jnp.float32)
    outc = jax.block_until_ready(encoder_forward(xc, params, row_block=64))
    refc = reference_forward(xc, params)
    assert outc.shape == (4, 32, DIM_OUT)
    assert jnp.allclose(outc, refc, **TOL), "mismatch vs reference (multi-block)"

    print("KERNEL_OK")
</pallas_src>

<mosaic_0001>
module attributes {stable_mosaic.version = 11 : i64} {
  func.func @encoder_kernel(%arg0: i32, %arg1: memref<2x128xbf16, #tpu.memory_space<vmem>>, %arg2: memref<128x256xbf16, #tpu.memory_space<vmem>>, %arg3: memref<256x512xbf16, #tpu.memory_space<vmem>>, %arg4: memref<256x256xbf16, #tpu.memory_space<vmem>>, %arg5: memref<256x128xbf16, #tpu.memory_space<vmem>>, %arg6: memref<5x512xf32, #tpu.memory_space<vmem>>, %arg7: memref<2x128xf32, #tpu.memory_space<vmem>>) attributes {dimension_semantics = [#tpu.dimension_semantics<parallel>], iteration_bounds = array<i64: 1>, scalar_prefetch = 0 : i64, scratch_operands = 0 : i64, tpu.core_type = #tpu.core_type<tc>, window_params = [{transform_indices = @transform_0, window_bounds = array<i64: 2, 128>}, {pipeline_mode = #tpu.pipeline_mode<synchronous>, transform_indices = @transform_1, window_bounds = array<i64: 128, 256>}, {pipeline_mode = #tpu.pipeline_mode<synchronous>, transform_indices = @transform_2, window_bounds = array<i64: 256, 512>}, {pipeline_mode = #tpu.pipeline_mode<synchronous>, transform_indices = @transform_3, window_bounds = array<i64: 256, 256>}, {pipeline_mode = #tpu.pipeline_mode<synchronous>, transform_indices = @transform_4, window_bounds = array<i64: 256, 128>}, {pipeline_mode = #tpu.pipeline_mode<synchronous>, transform_indices = @transform_5, window_bounds = array<i64: 5, 512>}, {transform_indices = @transform_6, window_bounds = array<i64: 2, 128>}]} {
    %c0 = arith.constant 0 : index
    %c0_0 = arith.constant 0 : index
    %0 = vector.load %arg2[%c0, %c0_0] : memref<128x256xbf16, #tpu.memory_space<vmem>>, vector<128x256xbf16>
    %c0_1 = arith.constant 0 : index
    %c0_2 = arith.constant 0 : index
    %1 = vector.load %arg3[%c0_1, %c0_2] : memref<256x512xbf16, #tpu.memory_space<vmem>>, vector<256x512xbf16>
    %c0_3 = arith.constant 0 : index
    %c0_4 = arith.constant 0 : index
    %2 = vector.load %arg4[%c0_3, %c0_4] : memref<256x256xbf16, #tpu.memory_space<vmem>>, vector<256x256xbf16>
    %c0_5 = arith.constant 0 : index
    %c0_6 = arith.constant 0 : index
    %3 = vector.load %arg5[%c0_5, %c0_6] : memref<256x128xbf16, #tpu.memory_space<vmem>>, vector<256x128xbf16>
    %c0_7 = arith.constant 0 : index
    %c0_8 = arith.constant 0 : index
    %4 = vector.load %arg6[%c0_7, %c0_8] : memref<5x512xf32, #tpu.memory_space<vmem>>, vector<1x256xf32>
    %c1 = arith.constant 1 : index
    %c0_9 = arith.constant 0 : index
    %5 = vector.load %arg6[%c1, %c0_9] : memref<5x512xf32, #tpu.memory_space<vmem>>, vector<1x512xf32>
    %c2 = arith.constant 2 : index
    %c0_10 = arith.constant 0 : index
    %6 = vector.load %arg6[%c2, %c0_10] : memref<5x512xf32, #tpu.memory_space<vmem>>, vector<1x256xf32>
    %c3 = arith.constant 3 : index
    %c0_11 = arith.constant 0 : index
    %7 = vector.load %arg6[%c3, %c0_11] : memref<5x512xf32, #tpu.memory_space<vmem>>, vector<1x256xf32>
    %c4 = arith.constant 4 : index
    %c0_12 = arith.constant 0 : index
    %8 = vector.load %arg6[%c4, %c0_12] : memref<5x512xf32, #tpu.memory_space<vmem>>, vector<1x128xf32>
    %c0_13 = arith.constant 0 : index
    %c0_14 = arith.constant 0 : index
    %9 = vector.load %arg1[%c0_13, %c0_14] : memref<2x128xbf16, #tpu.memory_space<vmem>>, vector<2x128xbf16>
    %cst = arith.constant dense<0.000000e+00> : vector<2x256xf32>
    %10 = tpu.matmul %9, %0, %cst {dimension_numbers = #tpu.dot_dimension_numbers<[1], [0], [0], [1], [0, 0, 1, 1], [], []>} : vector<2x128xbf16>, vector<128x256xbf16>, vector<2x256xf32> -> vector<2x256xf32>
    %11 = vector.broadcast %4 : vector<1x256xf32> to vector<2x256xf32>
    %12 = arith.addf %10, %11 : vector<2x256xf32>
    %13 = arith.truncf %12 : vector<2x256xf32> to vector<2x256xbf16>
    %cst_15 = arith.constant dense<0.000000e+00> : vector<2x512xf32>
    %14 = tpu.matmul %13, %1, %cst_15 {dimension_numbers = #tpu.dot_dimension_numbers<[1], [0], [0], [1], [0, 0, 1, 1], [], []>} : vector<2x256xbf16>, vector<256x512xbf16>, vector<2x512xf32> -> vector<2x512xf32>
    %15 = vector.broadcast %5 : vector<1x512xf32> to vector<2x512xf32>
    %16 = arith.addf %14, %15 : vector<2x512xf32>
    %17 = vector.extract_strided_slice %16 {offsets = [0, 0], sizes = [2, 256], strides = [1, 1]} : vector<2x512xf32> to vector<2x256xf32>
    %18 = vector.extract_strided_slice %16 {offsets = [0, 256], sizes = [2, 256], strides = [1, 1]} : vector<2x512xf32> to vector<2x256xf32>
    %19 = arith.subf %17, %18 : vector<2x256xf32>
    %20 = arith.mulf %19, %19 : vector<2x256xf32>
    %21 = arith.truncf %20 : vector<2x256xf32> to vector<2x256xbf16>
    %cst_16 = arith.constant dense<0.000000e+00> : vector<2x256xf32>
    %22 = tpu.matmul %21, %2, %cst_16 {dimension_numbers = #tpu.dot_dimension_numbers<[1], [0], [0], [1], [0, 0, 1, 1], [], []>} : vector<2x256xbf16>, vector<256x256xbf16>, vector<2x256xf32> -> vector<2x256xf32>
    %cst_17 = arith.constant 9.99999974E-6 : f32
    %23 = vector.broadcast %cst_17 : f32 to vector<2x256xf32>
    %24 = arith.addf %22, %23 : vector<2x256xf32>
    %25 = math.rsqrt %24 : vector<2x256xf32>
    %26 = arith.mulf %19, %25 : vector<2x256xf32>
    %27 = vector.broadcast %6 : vector<1x256xf32> to vector<2x256xf32>
    %28 = arith.mulf %26, %27 : vector<2x256xf32>
    %29 = vector.broadcast %7 : vector<1x256xf32> to vector<2x256xf32>
    %30 = arith.addf %28, %29 : vector<2x256xf32>
    %cst_18 = arith.constant 0.000000e+00 : f32
    %31 = vector.broadcast %cst_18 : f32 to vector<2x256xf32>
    %32 = arith.maximumf %30, %31 : vector<2x256xf32>
    %33 = arith.addf %12, %32 : vector<2x256xf32>
    %34 = arith.truncf %33 : vector<2x256xf32> to vector<2x256xbf16>
    %cst_19 = arith.constant dense<0.000000e+00> : vector<2x512xf32>
    %35 = tpu.matmul %34, %1, %cst_19 {dimension_numbers = #tpu.dot_dimension_numbers<[1], [0], [0], [1], [0, 0, 1, 1], [], []>} : vector<2x256xbf16>, vector<256x512xbf16>, vector<2x512xf32> -> vector<2x512xf32>
    %36 = vector.broadcast %5 : vector<1x512xf32> to vector<2x512xf32>
    %37 = arith.addf %35, %36 : vector<2x512xf32>
    %38 = vector.extract_strided_slice %37 {offsets = [0, 0], sizes = [2, 256], strides = [1, 1]} : vector<2x512xf32> to vector<2x256xf32>
    %39 = vector.extract_strided_slice %37 {offsets = [0, 256], sizes = [2, 256], strides = [1, 1]} : vector<2x512xf32> to vector<2x256xf32>
    %40 = arith.subf %38, %39 : vector<2x256xf32>
    %41 = arith.mulf %40, %40 : vector<2x256xf32>
    %42 = arith.truncf %41 : vector<2x256xf32> to vector<2x256xbf16>
    %cst_20 = arith.constant dense<0.000000e+00> : vector<2x256xf32>
    %43 = tpu.matmul %42, %2, %cst_20 {dimension_numbers = #tpu.dot_dimension_numbers<[1], [0], [0], [1], [0, 0, 1, 1], [], []>} : vector<2x256xbf16>, vector<256x256xbf16>, vector<2x256xf32> -> vector<2x256xf32>
    %cst_21 = arith.constant 9.99999974E-6 : f32
    %44 = vector.broadcast %cst_21 : f32 to vector<2x256xf32>
    %45 = arith.addf %43, %44 : vector<2x256xf32>
    %46 = math.rsqrt %45 : vector<2x256xf32>
    %47 = arith.mulf %40, %46 : vector<2x256xf32>
    %48 = vector.broadcast %6 : vector<1x256xf32> to vector<2x256xf32>
    %49 = arith.mulf %47, %48 : vector<2x256xf32>
    %50 = vector.broadcast %7 : vector<1x256xf32> to vector<2x256xf32>
    %51 = arith.addf %49, %50 : vector<2x256xf32>
    %cst_22 = arith.constant 0.000000e+00 : f32
    %52 = vector.broadcast %cst_22 : f32 to vector<2x256xf32>
    %53 = arith.maximumf %51, %52 : vector<2x256xf32>
    %54 = arith.addf %33, %53 : vector<2x256xf32>
    %55 = arith.truncf %54 : vector<2x256xf32> to vector<2x256xbf16>
    %cst_23 = arith.constant dense<0.000000e+00> : vector<2x128xf32>
    %56 = tpu.matmul %55, %3, %cst_23 {dimension_numbers = #tpu.dot_dimension_numbers<[1], [0], [0], [1], [0, 0, 1, 1], [], []>} : vector<2x256xbf16>, vector<256x128xbf16>, vector<2x128xf32> -> vector<2x128xf32>
    %57 = vector.broadcast %8 : vector<1x128xf32> to vector<2x128xf32>
    %58 = arith.addf %56, %57 : vector<2x128xf32>
    %c0_24 = arith.constant 0 : index
    %c0_25 = arith.constant 0 : index
    %59 = vector.load %arg7[%c0_24, %c0_25] : memref<2x128xf32, #tpu.memory_space<vmem>>, vector<2x128xf32>
    tpu.vector_store %arg7[%c0_24, %c0_25], %58 {strides = array<i32>} : memref<2x128xf32, #tpu.memory_space<vmem>>, vector<2x128xf32>,
    return
  }
  func.func @transform_0(%arg0: i32) -> (i32, i32) {
    %c0_i32 = arith.constant 0 : i32
    %c0_i32_0 = arith.constant 0 : i32
    return %arg0, %c0_i32 : i32, i32
  }
  func.func @transform_1(%arg0: i32) -> (i32, i32) {
    %c0_i32 = arith.constant 0 : i32
    %c0_i32_0 = arith.constant 0 : i32
    %c0_i32_1 = arith.constant 0 : i32
    return %c0_i32, %c0_i32_0 : i32, i32
  }
  func.func @transform_2(%arg0: i32) -> (i32, i32) {
    %c0_i32 = arith.constant 0 : i32
    %c0_i32_0 = arith.constant 0 : i32
    %c0_i32_1 = arith.constant 0 : i32
    return %c0_i32, %c0_i32_0 : i32, i32
  }
  func.func @transform_3(%arg0: i32) -> (i32, i32) {
    %c0_i32 = arith.constant 0 : i32
    %c0_i32_0 = arith.constant 0 : i32
    %c0_i32_1 = arith.constant 0 : i32
    return %c0_i32, %c0_i32_0 : i32, i32
  }
  func.func @transform_4(%arg0: i32) -> (i32, i32) {
    %c0_i32 = arith.constant 0 : i32
    %c0_i32_0 = arith.constant 0 : i32
    %c0_i32_1 = arith.constant 0 : i32
    return %c0_i32, %c0_i32_0 : i32, i32
  }
  func.func @transform_5(%arg0: i32) -> (i32, i32) {
    %c0_i32 = arith.constant 0 : i32
    %c0_i32_0 = arith.constant 0 : i32
    %c0_i32_1 = arith.constant 0 : i32
    return %c0_i32, %c0_i32_0 : i32, i32
  }
  func.func @transform_6(%arg0: i32) -> (i32, i32) {
    %c0_i32 = arith.constant 0 : i32
    %c0_i32_0 = arith.constant 0 : i32
    return %arg0, %c0_i32 : i32, i32
  }
}

</mosaic_0001>

<llo_original>
// kernel: tpu_custom_call.1
$region0: #{tpu_custom_call.1}
  #allocation0 [shape = 'u32[]', space=smem, size = 0x4, offset = 0x4, fixed_abs, tag = 'smem constant byte address 0x4 - core index']
  #allocation1 [shape = 'u32[144,128]{1,0:T(1,128)}', space=vmem, size = 0x12000, scoped, tag = 'internal scratch']
  %s0 = inlined_call_operand.hbm [shape: bf16[2,128], index: 0, kind: input, shape index: {}]
  %s1 = inlined_call_operand.hbm [shape: bf16[128,256], index: 1, kind: input, shape index: {}]
  %s2 = inlined_call_operand.hbm [shape: bf16[256,512], index: 2, kind: input, shape index: {}]
  %s3 = inlined_call_operand.hbm [shape: bf16[256,256], index: 3, kind: input, shape index: {}]
  %s4 = inlined_call_operand.hbm [shape: bf16[256,128], index: 4, kind: input, shape index: {}]
  %s5 = inlined_call_operand.hbm [shape: f32[5,512], index: 5, kind: input, shape index: {}]
  %s6 = inlined_call_operand.hbm [shape: f32[2,128], index: 6, kind: output, shape index: {}]
  %s7 = sld [smem:[#allocation0]]
  $region58: #{tpu_custom_call.1} parent=0
    _
  %s9 = ssub.s32 1, %s7
  %s10 = scalar_select 0, %s9, %s7
  $region1: #{tpu_custom_call.1} parent=0
    #allocation2 [shape = 'u8[512]{0}', space=vmem, size = 0x400, scoped, tag = 'input window, operand 0, single buffered']
    #allocation3 [shape = 's32[1]{0}', space=sflag, size = 0x4, scoped, tag = 'scoped memory for tpu_custom_call.1']
    #allocation4 [shape = 's32[1]{0}', space=sflag, size = 0x4, scoped, tag = 'scoped memory for tpu_custom_call.1']
    #allocation5 [shape = 'u8[65536]{0}', space=vmem, size = 0x10000, scoped, tag = 'input window, operand 1, single buffered']
    #allocation6 [shape = 's32[1]{0}', space=sflag, size = 0x4, scoped, tag = 'scoped memory for tpu_custom_call.1']
    #allocation7 [shape = 'u8[262144]{0}', space=vmem, size = 0x40000, scoped, tag = 'input window, operand 2, single buffered']
    #allocation8 [shape = 'u8[131072]{0}', space=vmem, size = 0x20000, scoped, tag = 'input window, operand 3, single buffered']
    #allocation9 [shape = 's32[1]{0}', space=sflag, size = 0x4, scoped, tag = 'scoped memory for tpu_custom_call.1']
    #allocation10 [shape = 'u8[65536]{0}', space=vmem, size = 0x10000, scoped, tag = 'input window, operand 4, single buffered']
    #allocation11 [shape = 'u8[16384]{0}', space=vmem, size = 0x4000, scoped, tag = 'input window, operand 5, single buffered']
    #allocation12 [shape = 's32[1]{0}', space=sflag, size = 0x4, scoped, tag = 'scoped memory for tpu_custom_call.1']
    #allocation13 [shape = 'u8[1024]{0}', space=vmem, size = 0x400, scoped, tag = 'output window, operand 0, single buffered']
    %11 = vsyncpa [#allocation3], 0
    %12 = vsyncpa [#allocation6], 0
    %13 = vsyncpa [#allocation9], 0
    %14 = vsyncpa [#allocation12], 0
    %15 = vsyncpa [#allocation4], 0
    // Predicated region
    $region2: #{tpu_custom_call.1} parent=1 // pred_check
      _
    $region3: #{tpu_custom_call.1} parent=1 // pred_check_branch
      %17 = sbr.rel (0) target = $region5
    $region4: #{tpu_custom_call.1} parent=1 // pred_region
      %s19 = ssub.s32 16, 16
      %20 = vsyncadd [#allocation3], %s19
      %s22 = sshll.u32 [#allocation2], 4
      %s23 = int_to_ptr.vmem [resolvable:$true] %s22
      %25 = dma.hbm_to_vmem [thread:$0]  %s0, 16, %s23, [#allocation3]
    $region5: #{tpu_custom_call.1} parent=1 // pred_fallthru
      _
    // Predicated region
    $region6: #{tpu_custom_call.1} parent=1 // pred_check
      _
    $region7: #{tpu_custom_call.1} parent=1 // pred_check_branch
      %27 = sbr.rel (0) target = $region9
    $region8: #{tpu_custom_call.1} parent=1 // pred_region
      %s29 = ssub.s32 2048, 2048
      %30 = vsyncadd [#allocation6], %s29
      %s31 = sshll.u32 [#allocation5], 4
      %s32 = int_to_ptr.vmem [resolvable:$true] %s31
      %37 = dma.hbm_to_vmem [thread:$0]  %s1, 2048, %s32, [#allocation6], 128, 128, 8
    $region9: #{tpu_custom_call.1} parent=1 // pred_fallthru
      _
    // Predicated region
    $region10: #{tpu_custom_call.1} parent=1 // pred_check
      _
    $region11: #{tpu_custom_call.1} parent=1 // pred_check_branch
      %39 = sbr.rel (0) target = $region13
    $region12: #{tpu_custom_call.1} parent=1 // pred_region
      %s41 = ssub.s32 8192, 8192
      %42 = vsyncadd [#allocation6], %s41
      %s43 = sshll.u32 [#allocation7], 4
      %s44 = int_to_ptr.vmem [resolvable:$true] %s43
      %49 = dma.hbm_to_vmem [thread:$0]  %s2, 8192, %s44, [#allocation6], 256, 256, 16
    $region13: #{tpu_custom_call.1} parent=1 // pred_fallthru
      _
    // Predicated region
    $region14: #{tpu_custom_call.1} parent=1 // pred_check
      _
    $region15: #{tpu_custom_call.1} parent=1 // pred_check_branch
      %51 = sbr.rel (0) target = $region17
    $region16: #{tpu_custom_call.1} parent=1 // pred_region
      %s53 = ssub.s32 4096, 4096
      %54 = vsyncadd [#allocation9], %s53
      %s55 = sshll.u32 [#allocation8], 4
      %s56 = int_to_ptr.vmem [resolvable:$true] %s55
      %61 = dma.hbm_to_vmem [thread:$0]  %s3, 4096, %s56, [#allocation9], 128, 128, 8
    $region17: #{tpu_custom_call.1} parent=1 // pred_fallthru
      _
    // Predicated region
    $region18: #{tpu_custom_call.1} parent=1 // pred_check
      _
    $region19: #{tpu_custom_call.1} parent=1 // pred_check_branch
      %63 = sbr.rel (0) target = $region21
    $region20: #{tpu_custom_call.1} parent=1 // pred_region
      %s65 = ssub.s32 2048, 2048
      %66 = vsyncadd [#allocation9], %s65
      %s67 = sshll.u32 [#allocation10], 4
      %s68 = int_to_ptr.vmem [resolvable:$true] %s67
      %73 = dma.hbm_to_vmem [thread:$0]  %s4, 2048, %s68, [#allocation9], 64, 64, 4
    $region21: #{tpu_custom_call.1} parent=1 // pred_fallthru
      _
    // Predicated region
    $region22: #{tpu_custom_call.1} parent=1 // pred_check
      _
    $region23: #{tpu_custom_call.1} parent=1 // pred_check_branch
      %75 = sbr.rel (0) target = $region25
    $region24: #{tpu_custom_call.1} parent=1 // pred_region
      %s77 = ssub.s32 512, 512
      %78 = vsyncadd [#allocation12], %s77
      %s80 = sshll.u32 [#allocation11], 4
      %s81 = int_to_ptr.vmem [resolvable:$true] %s80
      %83 = dma.hbm_to_vmem [thread:$0]  %s5, 512, %s81, [#allocation12]
    $region25: #{tpu_custom_call.1} parent=1 // pred_fallthru
      _
    // Predicated region
    $region26: #{tpu_custom_call.1} parent=1 // pred_check
      _
    $region27: #{tpu_custom_call.1} parent=1 // pred_check_branch
      %85 = sbr.rel (0) target = $region29
    $region28: #{tpu_custom_call.1} parent=1 // pred_region
      %86 = dma.done [#allocation3], 16
    $region29: #{tpu_custom_call.1} parent=1 // pred_fallthru
      _
    // Predicated region
    $region30: #{tpu_custom_call.1} parent=1 // pred_check
      _
    $region31: #{tpu_custom_call.1} parent=1 // pred_check_branch
      %88 = sbr.rel (0) target = $region33
    $region32: #{tpu_custom_call.1} parent=1 // pred_region
      %89 = dma.done [#allocation6], 2048
    $region33: #{tpu_custom_call.1} parent=1 // pred_fallthru
      _
    // Predicated region
    $region34: #{tpu_custom_call.1} parent=1 // pred_check
      _
    $region35: #{tpu_custom_call.1} parent=1 // pred_check_branch
      %91 = sbr.rel (0) target = $region37
    $region36: #{tpu_custom_call.1} parent=1 // pred_region
      %92 = dma.done [#allocation6], 8192
    $region37: #{tpu_custom_call.1} parent=1 // pred_fallthru
      _
    // Predicated region
    $region38: #{tpu_custom_call.1} parent=1 // pred_check
      _
    $region39: #{tpu_custom_call.1} parent=1 // pred_check_branch
      %94 = sbr.rel (0) target = $region41
    $region40: #{tpu_custom_call.1} parent=1 // pred_region
      %95 = dma.done [#allocation9], 4096
    $region41: #{tpu_custom_call.1} parent=1 // pred_fallthru
      _
    // Predicated region
    $region42: #{tpu_custom_call.1} parent=1 // pred_check
      _
    $region43: #{tpu_custom_call.1} parent=1 // pred_check_branch
      %97 = sbr.rel (0) target = $region45
    $region44: #{tpu_custom_call.1} parent=1 // pred_region
      %98 = dma.done [#allocation9], 2048
    $region45: #{tpu_custom_call.1} parent=1 // pred_fallthru
      _
    // Predicated region
    $region46: #{tpu_custom_call.1} parent=1 // pred_check
      _
    $region47: #{tpu_custom_call.1} parent=1 // pred_check_branch
      %100 = sbr.rel (0) target = $region49
    $region48: #{tpu_custom_call.1} parent=1 // pred_region
      %101 = dma.done [#allocation12], 512
    $region49: #{tpu_custom_call.1} parent=1 // pred_fallthru
      _
    %v103 = vld [vmem:[#allocation5] sm:$0xff]
    %v104 = vld [vmem:[#allocation5 + $0x8] sm:$0xff]
    %v105 = vld [vmem:[#allocation5 + $0x10] sm:$0xff]
    %v106 = vld [vmem:[#allocation5 + $0x18] sm:$0xff]
    %v107 = vld [vmem:[#allocation5 + $0x20] sm:$0xff]
    %v108 = vld [vmem:[#allocation5 + $0x28] sm:$0xff]
    %v109 = vld [vmem:[#allocation5 + $0x30] sm:$0xff]
    %v110 = vld [vmem:[#allocation5 + $0x38] sm:$0xff]
    %v111 = vld [vmem:[#allocation5 + $0x40] sm:$0xff]
    %v112 = vld [vmem:[#allocation5 + $0x48] sm:$0xff]
    %v113 = vld [vmem:[#allocation5 + $0x50] sm:$0xff]
    %v114 = vld [vmem:[#allocation5 + $0x58] sm:$0xff]
    %v115 = vld [vmem:[#allocation5 + $0x60] sm:$0xff]
    %v116 = vld [vmem:[#allocation5 + $0x68] sm:$0xff]
    %v117 = vld [vmem:[#allocation5 + $0x70] sm:$0xff]
    %v118 = vld [vmem:[#allocation5 + $0x78] sm:$0xff]
    %v119 = vld [vmem:[#allocation7] sm:$0xff]
    %v120 = vld [vmem:[#allocation7 + $0x8] sm:$0xff]
    %v121 = vld [vmem:[#allocation7 + $0x10] sm:$0xff]
    %v122 = vld [vmem:[#allocation7 + $0x18] sm:$0xff]
    %v123 = vld [vmem:[#allocation7 + $0x20] sm:$0xff]
    %v124 = vld [vmem:[#allocation7 + $0x28] sm:$0xff]
    %v125 = vld [vmem:[#allocation7 + $0x30] sm:$0xff]
    %v126 = vld [vmem:[#allocation7 + $0x38] sm:$0xff]
    %v127 = vld [vmem:[#allocation7 + $0x40] sm:$0xff]
    %v128 = vld [vmem:[#allocation7 + $0x48] sm:$0xff]
    %v129 = vld [vmem:[#allocation7 + $0x50] sm:$0xff]
    %v130 = vld [vmem:[#allocation7 + $0x58] sm:$0xff]
    %v131 = vld [vmem:[#allocation7 + $0x60] sm:$0xff]
    %v132 = vld [vmem:[#allocation7 + $0x68] sm:$0xff]
    %v133 = vld [vmem:[#allocation7 + $0x70] sm:$0xff]
    %v134 = vld [vmem:[#allocation7 + $0x78] sm:$0xff]
    %v135 = vld [vmem:[#allocation7 + $0x80] sm:$0xff]
    %v136 = vld [vmem:[#allocation7 + $0x88] sm:$0xff]
    %v137 = vld [vmem:[#allocation7 + $0x90] sm:$0xff]
    %v138 = vld [vmem:[#allocation7 + $0x98] sm:$0xff]
    %v139 = vld [vmem:[#allocation7 + $0xa0] sm:$0xff]
    %v140 = vld [vmem:[#allocation7 + $0xa8] sm:$0xff]
    %v141 = vld [vmem:[#allocation7 + $0xb0] sm:$0xff]
    %v142 = vld [vmem:[#allocation7 + $0xb8] sm:$0xff]
    %v143 = vld [vmem:[#allocation7 + $0xc0] sm:$0xff]
    %v144 = vld [vmem:[#allocation7 + $0xc8] sm:$0xff]
    %v145 = vld [vmem:[#allocation7 + $0xd0] sm:$0xff]
    %v146 = vld [vmem:[#allocation7 + $0xd8] sm:$0xff]
    %v147 = vld [vmem:[#allocation7 + $0xe0] sm:$0xff]
    %v148 = vld [vmem:[#allocation7 + $0xe8] sm:$0xff]
    %v149 = vld [vmem:[#allocation7 + $0xf0] sm:$0xff]
    %v150 = vld [vmem:[#allocation7 + $0xf8] sm:$0xff]
    %v151 = vld [vmem:[#allocation7 + $0x100] sm:$0xff]
    %v152 = vld [vmem:[#allocation7 + $0x108] sm:$0xff]
    %v153 = vld [vmem:[#allocation7 + $0x110] sm:$0xff]
    %v154 = vld [vmem:[#allocation7 + $0x118] sm:$0xff]
    %v155 = vld [vmem:[#allocation7 + $0x120] sm:$0xff]
    %v156 = vld [vmem:[#allocation7 + $0x128] sm:$0xff]
    %v157 = vld [vmem:[#allocation7 + $0x130] sm:$0xff]
    %v158 = vld [vmem:[#allocation7 + $0x138] sm:$0xff]
    %v159 = vld [vmem:[#allocation7 + $0x140] sm:$0xff]
    %v160 = vld [vmem:[#allocation7 + $0x148] sm:$0xff]
    %v161 = vld [vmem:[#allocation7 + $0x150] sm:$0xff]
    %v162 = vld [vmem:[#allocation7 + $0x158] sm:$0xff]
    %v163 = vld [vmem:[#allocation7 + $0x160] sm:$0xff]
    %v164 = vld [vmem:[#allocation7 + $0x168] sm:$0xff]
    %v165 = vld [vmem:[#allocation7 + $0x170] sm:$0xff]
    %v166 = vld [vmem:[#allocation7 + $0x178] sm:$0xff]
    %v167 = vld [vmem:[#allocation7 + $0x180] sm:$0xff]
    %v168 = vld [vmem:[#allocation7 + $0x188] sm:$0xff]
    %v169 = vld [vmem:[#allocation7 + $0x190] sm:$0xff]
    %v170 = vld [vmem:[#allocation7 + $0x198] sm:$0xff]
    %v171 = vld [vmem:[#allocation7 + $0x1a0] sm:$0xff]
    %v172 = vld [vmem:[#allocation7 + $0x1a8] sm:$0xff]
    %v173 = vld [vmem:[#allocation7 + $0x1b0] sm:$0xff]
    %v174 = vld [vmem:[#allocation7 + $0x1b8] sm:$0xff]
    %v175 = vld [vmem:[#allocation7 + $0x1c0] sm:$0xff]
    %v176 = vld [vmem:[#allocation7 + $0x1c8] sm:$0xff]
    %v177 = vld [vmem:[#allocation7 + $0x1d0] sm:$0xff]
    %v178 = vld [vmem:[#allocation7 + $0x1d8] sm:$0xff]
    %v179 = vld [vmem:[#allocation7 + $0x1e0] sm:$0xff]
    %v180 = vld [vmem:[#allocation7 + $0x1e8] sm:$0xff]
    %v181 = vld [vmem:[#allocation7 + $0x1f0] sm:$0xff]
    %v182 = vld [vmem:[#allocation7 + $0x1f8] sm:$0xff]
    %v183 = vld [vmem:[#allocation8] sm:$0xff]
    %v184 = vld [vmem:[#allocation8 + $0x8] sm:$0xff]
    %v185 = vld [vmem:[#allocation8 + $0x10] sm:$0xff]
    %v186 = vld [vmem:[#allocation8 + $0x18] sm:$0xff]
    %v187 = vld [vmem:[#allocation8 + $0x20] sm:$0xff]
    %v188 = vld [vmem:[#allocation8 + $0x28] sm:$0xff]
    %v189 = vld [vmem:[#allocation8 + $0x30] sm:$0xff]
    %v190 = vld [vmem:[#allocation8 + $0x38] sm:$0xff]
    %v191 = vld [vmem:[#allocation8 + $0x40] sm:$0xff]
    %v192 = vld [vmem:[#allocation8 + $0x48] sm:$0xff]
    %v193 = vld [vmem:[#allocation8 + $0x50] sm:$0xff]
    %v194 = vld [vmem:[#allocation8 + $0x58] sm:$0xff]
    %v195 = vld [vmem:[#allocation8 + $0x60] sm:$0xff]
    %v196 = vld [vmem:[#allocation8 + $0x68] sm:$0xff]
    %v197 = vld [vmem:[#allocation8 + $0x70] sm:$0xff]
    %v198 = vld [vmem:[#allocation8 + $0x78] sm:$0xff]
    %v199 = vld [vmem:[#allocation8 + $0x80] sm:$0xff]
    %v200 = vld [vmem:[#allocation8 + $0x88] sm:$0xff]
    %v201 = vld [vmem:[#allocation8 + $0x90] sm:$0xff]
    %v202 = vld [vmem:[#allocation8 + $0x98] sm:$0xff]
    %v203 = vld [vmem:[#allocation8 + $0xa0] sm:$0xff]
    %v204 = vld [vmem:[#allocation8 + $0xa8] sm:$0xff]
    %v205 = vld [vmem:[#allocation8 + $0xb0] sm:$0xff]
    %v206 = vld [vmem:[#allocation8 + $0xb8] sm:$0xff]
    %v207 = vld [vmem:[#allocation8 + $0xc0] sm:$0xff]
    %v208 = vld [vmem:[#allocation8 + $0xc8] sm:$0xff]
    %v209 = vld [vmem:[#allocation8 + $0xd0] sm:$0xff]
    %v210 = vld [vmem:[#allocation8 + $0xd8] sm:$0xff]
    %v211 = vld [vmem:[#allocation8 + $0xe0] sm:$0xff]
    %v212 = vld [vmem:[#allocation8 + $0xe8] sm:$0xff]
    %v213 = vld [vmem:[#allocation8 + $0xf0] sm:$0xff]
    %v214 = vld [vmem:[#allocation8 + $0xf8] sm:$0xff]
    %v215 = vld [vmem:[#allocation10] sm:$0xf]
    %v216 = vld [vmem:[#allocation10 + $0x4] sm:$0xf]
    %v217 = vld [vmem:[#allocation10 + $0x8] sm:$0xf]
    %v218 = vld [vmem:[#allocation10 + $0xc] sm:$0xf]
    %v219 = vld [vmem:[#allocation10 + $0x10] sm:$0xf]
    %v220 = vld [vmem:[#allocation10 + $0x14] sm:$0xf]
    %v221 = vld [vmem:[#allocation10 + $0x18] sm:$0xf]
    %v222 = vld [vmem:[#allocation10 + $0x1c] sm:$0xf]
    %v223 = vld [vmem:[#allocation10 + $0x20] sm:$0xf]
    %v224 = vld [vmem:[#allocation10 + $0x24] sm:$0xf]
    %v225 = vld [vmem:[#allocation10 + $0x28] sm:$0xf]
    %v226 = vld [vmem:[#allocation10 + $0x2c] sm:$0xf]
    %v227 = vld [vmem:[#allocation10 + $0x30] sm:$0xf]
    %v228 = vld [vmem:[#allocation10 + $0x34] sm:$0xf]
    %v229 = vld [vmem:[#allocation10 + $0x38] sm:$0xf]
    %v230 = vld [vmem:[#allocation10 + $0x3c] sm:$0xf]
    %v231 = vld [vmem:[#allocation10 + $0x40] sm:$0xf]
    %v232 = vld [vmem:[#allocation10 + $0x44] sm:$0xf]
    %v233 = vld [vmem:[#allocation10 + $0x48] sm:$0xf]
    %v234 = vld [vmem:[#allocation10 + $0x4c] sm:$0xf]
    %v235 = vld [vmem:[#allocation10 + $0x50] sm:$0xf]
    %v236 = vld [vmem:[#allocation10 + $0x54] sm:$0xf]
    %v237 = vld [vmem:[#allocation10 + $0x58] sm:$0xf]
    %v238 = vld [vmem:[#allocation10 + $0x5c] sm:$0xf]
    %v239 = vld [vmem:[#allocation10 + $0x60] sm:$0xf]
    %v240 = vld [vmem:[#allocation10 + $0x64] sm:$0xf]
    %v241 = vld [vmem:[#allocation10 + $0x68] sm:$0xf]
    %v242 = vld [vmem:[#allocation10 + $0x6c] sm:$0xf]
    %v243 = vld [vmem:[#allocation10 + $0x70] sm:$0xf]
    %v244 = vld [vmem:[#allocation10 + $0x74] sm:$0xf]
    %v245 = vld [vmem:[#allocation10 + $0x78] sm:$0xf]
    %v246 = vld [vmem:[#allocation10 + $0x7c] sm:$0xf]
    %v247 = vld [vmem:[#allocation11] ss:$8 sm:$0x3]
    %s248 = scalar_lea.vmem [#allocation11], 1
    %v249 = vld [vmem:[%s248] ss:$8 sm:$0xf]
    %s250 = scalar_lea.vmem [#allocation11], 2
    %v251 = vld [vmem:[%s250] ss:$8 sm:$0x3]
    %s252 = scalar_lea.vmem [#allocation11], 3
    %v253 = vld [vmem:[%s252] ss:$8 sm:$0x3]
    %v254 = vld [vmem:[#allocation11 + $0x4] ss:$0 sm:$0xff]
    %v255 = vld [vmem:[#allocation2] sm:$0x1]
    %v257 = vlaneseq
    %v258 = vshrl.u32 %v257, 7
    %v259 = vsub.s32 0, %v258
    %v260 = vrot.slane %v247, %v259
    %v261 = vlaneseq
    %v262 = vshrl.u32 %v261, 7
    %v263 = vsub.s32 1, %v262
    %v264 = vrot.slane %v247, %v263
    %v283 = vunpack.c.l.b16 %v103
    %v284 = vunpack.c.h.b16 %v103
    %v285 = vunpack.c.l.b16 %v104
    %v286 = vunpack.c.h.b16 %v104
    %v287 = vunpack.c.l.b16 %v105
    %v288 = vunpack.c.h.b16 %v105
    %v289 = vunpack.c.l.b16 %v106
    %v290 = vunpack.c.h.b16 %v106
    %v291 = vunpack.c.l.b16 %v107
    %v292 = vunpack.c.h.b16 %v107
    %v293 = vunpack.c.l.b16 %v108
    %v294 = vunpack.c.h.b16 %v108
    %v295 = vunpack.c.l.b16 %v109
    %v296 = vunpack.c.h.b16 %v109
    %v297 = vunpack.c.l.b16 %v110
    %v298 = vunpack.c.h.b16 %v110
    %v299 = vunpack.c.l.b16 %v111
    %v300 = vunpack.c.h.b16 %v111
    %v301 = vunpack.c.l.b16 %v112
    %v302 = vunpack.c.h.b16 %v112
    %v303 = vunpack.c.l.b16 %v113
    %v304 = vunpack.c.h.b16 %v113
    %v305 = vunpack.c.l.b16 %v114
    %v306 = vunpack.c.h.b16 %v114
    %v307 = vunpack.c.l.b16 %v115
    %v308 = vunpack.c.h.b16 %v115
    %v309 = vunpack.c.l.b16 %v116
    %v310 = vunpack.c.h.b16 %v116
    %v311 = vunpack.c.l.b16 %v117
    %v312 = vunpack.c.h.b16 %v117
    %v313 = vunpack.c.l.b16 %v118
    %v314 = vunpack.c.h.b16 %v118
    %v315 = vpack.c.b16 %v285, %v283
    %v316 = vpack.c.b16 %v286, %v284
    %v317 = vpack.c.b16 %v289, %v287
    %v318 = vpack.c.b16 %v290, %v288
    %v319 = vpack.c.b16 %v293, %v291
    %v320 = vpack.c.b16 %v294, %v292
    %v321 = vpack.c.b16 %v297, %v295
    %v322 = vpack.c.b16 %v298, %v296
    %v323 = vpack.c.b16 %v301, %v299
    %v324 = vpack.c.b16 %v302, %v300
    %v325 = vpack.c.b16 %v305, %v303
    %v326 = vpack.c.b16 %v306, %v304
    %v327 = vpack.c.b16 %v309, %v307
    %v328 = vpack.c.b16 %v310, %v308
    %v329 = vpack.c.b16 %v313, %v311
    %v330 = vpack.c.b16 %v314, %v312
    %347 = vmatprep.subr.bf16.mxu0 %v330
    %348 = vmatpush1.bf16.msra.mxu0 %v329
    %349 = vmatprep.subr.bf16.mxu0 %v328
    %350 = vmatpush1.bf16.msra.mxu0 %v327
    %351 = vmatprep.subr.bf16.mxu0 %v326
    %352 = vmatpush1.bf16.msra.mxu0 %v325
    %353 = vmatprep.subr.bf16.mxu0 %v324
    %354 = vmatpush1.bf16.msra.mxu0 %v323
    %355 = vmatprep.subr.bf16.mxu0 %v322
    %356 = vmatpush1.bf16.msra.mxu0 %v321
    %357 = vmatprep.subr.bf16.mxu0 %v320
    %358 = vmatpush1.bf16.msra.mxu0 %v319
    %359 = vmatprep.subr.bf16.mxu0 %v318
    %360 = vmatpush1.bf16.msra.mxu0 %v317
    %361 = vmatprep.subr.bf16.mxu0 %v316
    %362 = vmatpush1.bf16.msra.mxu0 %v315
    %363 = vmatprep.subr.bf16.mxu0 0
    %364 = vmatpush2.bf16.msra.mxu0 0
    %365 = vmatprep.subr.bf16.mxu0 0
    %366 = vmatpush2.bf16.msra.mxu0 0
    %367 = vmatprep.subr.bf16.mxu0 0
    %368 = vmatpush2.bf16.msra.mxu0 0
    %369 = vmatprep.subr.bf16.mxu0 0
    %370 = vmatpush2.bf16.msra.mxu0 0
    %371 = vmatprep.subr.bf16.mxu0 0
    %372 = vmatpush2.bf16.msra.mxu0 0
    %373 = vmatprep.subr.bf16.mxu0 0
    %374 = vmatpush2.bf16.msra.mxu0 0
    %375 = vmatprep.subr.bf16.mxu0 0
    %376 = vmatpush2.bf16.msra.mxu0 0
    %377 = vmatprep.subr.bf16.mxu0 0
    %378 = vmatpush2.bf16.msra.mxu0 0
    %379 = vmatprep.mubr.bf16.mxu0 0
    %380 = vmatmul.mubr.bf16.gmra.mxu0 %v255
    %v381 = vpop.f32.mrf.mxu0
    %v382 = vadd.f32 %v260, %v381
    %v383 = vpop.f32.mrf.mxu0
    %v384 = vadd.f32 %v264, %v383
    %v385 = vpop.f32.mrf.mxu0
    %v386 = vpop.f32.mrf.mxu0
    %387 = vdwg.mxu0
    %v388 = vpack.c.bf16 %v382, %v382
    %v389 = vpack.c.bf16 %v384, %v384
    %v391 = vlaneseq
    %v392 = vshrl.u32 %v391, 7
    %v393 = vsub.s32 0, %v392
    %v394 = vrot.slane %v249, %v393
    %v395 = vlaneseq
    %v396 = vshrl.u32 %v395, 7
    %v397 = vsub.s32 1, %v396
    %v398 = vrot.slane %v249, %v397
    %v399 = vlaneseq
    %v400 = vshrl.u32 %v399, 7
    %v401 = vsub.s32 2, %v400
    %v402 = vrot.slane %v249, %v401
    %v403 = vlaneseq
    %v404 = vshrl.u32 %v403, 7
    %v405 = vsub.s32 3, %v404
    %v406 = vrot.slane %v249, %v405
    %v475 = vunpack.c.l.b16 %v119
    %v476 = vunpack.c.h.b16 %v119
    %v477 = vunpack.c.l.b16 %v120
    %v478 = vunpack.c.h.b16 %v120
    %v479 = vunpack.c.l.b16 %v121
    %v480 = vunpack.c.h.b16 %v121
    %v481 = vunpack.c.l.b16 %v122
    %v482 = vunpack.c.h.b16 %v122
    %v483 = vunpack.c.l.b16 %v123
    %v484 = vunpack.c.h.b16 %v123
    %v485 = vunpack.c.l.b16 %v124
    %v486 = vunpack.c.h.b16 %v124
    %v487 = vunpack.c.l.b16 %v125
    %v488 = vunpack.c.h.b16 %v125
    %v489 = vunpack.c.l.b16 %v126
    %v490 = vunpack.c.h.b16 %v126
    %v491 = vunpack.c.l.b16 %v127
    %v492 = vunpack.c.h.b16 %v127
    %v493 = vunpack.c.l.b16 %v128
    %v494 = vunpack.c.h.b16 %v128
    %v495 = vunpack.c.l.b16 %v129
    %v496 = vunpack.c.h.b16 %v129
    %v497 = vunpack.c.l.b16 %v130
    %v498 = vunpack.c.h.b16 %v130
    %v499 = vunpack.c.l.b16 %v131
    %v500 = vunpack.c.h.b16 %v131
    %v501 = vunpack.c.l.b16 %v132
    %v502 = vunpack.c.h.b16 %v132
    %v503 = vunpack.c.l.b16 %v133
    %v504 = vunpack.c.h.b16 %v133
    %v505 = vunpack.c.l.b16 %v134
    %v506 = vunpack.c.h.b16 %v134
    %v507 = vunpack.c.l.b16 %v135
    %v508 = vunpack.c.h.b16 %v135
    %v509 = vunpack.c.l.b16 %v136
    %v510 = vunpack.c.h.b16 %v136
    %v511 = vunpack.c.l.b16 %v137
    %v512 = vunpack.c.h.b16 %v137
    %v513 = vunpack.c.l.b16 %v138
    %v514 = vunpack.c.h.b16 %v138
    %v515 = vunpack.c.l.b16 %v139
    %v516 = vunpack.c.h.b16 %v139
    %v517 = vunpack.c.l.b16 %v140
    %v518 = vunpack.c.h.b16 %v140
    %v519 = vunpack.c.l.b16 %v141
    %v520 = vunpack.c.h.b16 %v141
    %v521 = vunpack.c.l.b16 %v142
    %v522 = vunpack.c.h.b16 %v142
    %v523 = vunpack.c.l.b16 %v143
    %v524 = vunpack.c.h.b16 %v143
    %v525 = vunpack.c.l.b16 %v144
    %v526 = vunpack.c.h.b16 %v144
    %v527 = vunpack.c.l.b16 %v145
    %v528 = vunpack.c.h.b16 %v145
    %v529 = vunpack.c.l.b16 %v146
    %v530 = vunpack.c.h.b16 %v146
    %v531 = vunpack.c.l.b16 %v147
    %v532 = vunpack.c.h.b16 %v147
    %v533 = vunpack.c.l.b16 %v148
    %v534 = vunpack.c.h.b16 %v148
    %v535 = vunpack.c.l.b16 %v149
    %v536 = vunpack.c.h.b16 %v149
    %v537 = vunpack.c.l.b16 %v150
    %v538 = vunpack.c.h.b16 %v150
    %v539 = vunpack.c.l.b16 %v151
    %v540 = vunpack.c.h.b16 %v151
    %v541 = vunpack.c.l.b16 %v152
    %v542 = vunpack.c.h.b16 %v152
    %v543 = vunpack.c.l.b16 %v153
    %v544 = vunpack.c.h.b16 %v153
    %v545 = vunpack.c.l.b16 %v154
    %v546 = vunpack.c.h.b16 %v154
    %v547 = vunpack.c.l.b16 %v155
    %v548 = vunpack.c.h.b16 %v155
    %v549 = vunpack.c.l.b16 %v156
    %v550 = vunpack.c.h.b16 %v156
    %v551 = vunpack.c.l.b16 %v157
    %v552 = vunpack.c.h.b16 %v157
    %v553 = vunpack.c.l.b16 %v158
    %v554 = vunpack.c.h.b16 %v158
    %v555 = vunpack.c.l.b16 %v159
    %v556 = vunpack.c.h.b16 %v159
    %v557 = vunpack.c.l.b16 %v160
    %v558 = vunpack.c.h.b16 %v160
    %v559 = vunpack.c.l.b16 %v161
    %v560 = vunpack.c.h.b16 %v161
    %v561 = vunpack.c.l.b16 %v162
    %v562 = vunpack.c.h.b16 %v162
    %v563 = vunpack.c.l.b16 %v163
    %v564 = vunpack.c.h.b16 %v163
    %v565 = vunpack.c.l.b16 %v164
    %v566 = vunpack.c.h.b16 %v164
    %v567 = vunpack.c.l.b16 %v165
    %v568 = vunpack.c.h.b16 %v165
    %v569 = vunpack.c.l.b16 %v166
    %v570 = vunpack.c.h.b16 %v166
    %v571 = vunpack.c.l.b16 %v167
    %v572 = vunpack.c.h.b16 %v167
    %v573 = vunpack.c.l.b16 %v168
    %v574 = vunpack.c.h.b16 %v168
    %v575 = vunpack.c.l.b16 %v169
    %v576 = vunpack.c.h.b16 %v169
    %v577 = vunpack.c.l.b16 %v170
    %v578 = vunpack.c.h.b16 %v170
    %v579 = vunpack.c.l.b16 %v171
    %v580 = vunpack.c.h.b16 %v171
    %v581 = vunpack.c.l.b16 %v172
    %v582 = vunpack.c.h.b16 %v172
    %v583 = vunpack.c.l.b16 %v173
    %v584 = vunpack.c.h.b16 %v173
    %v585 = vunpack.c.l.b16 %v174
    %v586 = vunpack.c.h.b16 %v174
    %v587 = vunpack.c.l.b16 %v175
    %v588 = vunpack.c.h.b16 %v175
    %v589 = vunpack.c.l.b16 %v176
    %v590 = vunpack.c.h.b16 %v176
    %v591 = vunpack.c.l.b16 %v177
    %v592 = vunpack.c.h.b16 %v177
    %v593 = vunpack.c.l.b16 %v178
    %v594 = vunpack.c.h.b16 %v178
    %v595 = vunpack.c.l.b16 %v179
    %v596 = vunpack.c.h.b16 %v179
    %v597 = vunpack.c.l.b16 %v180
    %v598 = vunpack.c.h.b16 %v180
    %v599 = vunpack.c.l.b16 %v181
    %v600 = vunpack.c.h.b16 %v181
    %v601 = vunpack.c.l.b16 %v182
    %v602 = vunpack.c.h.b16 %v182
    %v603 = vpack.c.b16 %v479, %v475
    %v604 = vpack.c.b16 %v480, %v476
    %v605 = vpack.c.b16 %v481, %v477
    %v606 = vpack.c.b16 %v482, %v478
    %v607 = vpack.c.b16 %v487, %v483
    %v608 = vpack.c.b16 %v488, %v484
    %v609 = vpack.c.b16 %v489, %v485
    %v610 = vpack.c.b16 %v490, %v486
    %v611 = vpack.c.b16 %v495, %v491
    %v612 = vpack.c.b16 %v496, %v492
    %v613 = vpack.c.b16 %v497, %v493
    %v614 = vpack.c.b16 %v498, %v494
    %v615 = vpack.c.b16 %v503, %v499
    %v616 = vpack.c.b16 %v504, %v500
    %v617 = vpack.c.b16 %v505, %v501
    %v618 = vpack.c.b16 %v506, %v502
    %v619 = vpack.c.b16 %v511, %v507
    %v620 = vpack.c.b16 %v512, %v508
    %v621 = vpack.c.b16 %v513, %v509
    %v622 = vpack.c.b16 %v514, %v510
    %v623 = vpack.c.b16 %v519, %v515
    %v624 = vpack.c.b16 %v520, %v516
    %v625 = vpack.c.b16 %v521, %v517
    %v626 = vpack.c.b16 %v522, %v518
    %v627 = vpack.c.b16 %v527, %v523
    %v628 = vpack.c.b16 %v528, %v524
    %v629 = vpack.c.b16 %v529, %v525
    %v630 = vpack.c.b16 %v530, %v526
    %v631 = vpack.c.b16 %v535, %v531
    %v632 = vpack.c.b16 %v536, %v532
    %v633 = vpack.c.b16 %v537, %v533
    %v634 = vpack.c.b16 %v538, %v534
    %v635 = vpack.c.b16 %v543, %v539
    %v636 = vpack.c.b16 %v544, %v540
    %v637 = vpack.c.b16 %v545, %v541
    %v638 = vpack.c.b16 %v546, %v542
    %v639 = vpack.c.b16 %v551, %v547
    %v640 = vpack.c.b16 %v552, %v548
    %v641 = vpack.c.b16 %v553, %v549
    %v642 = vpack.c.b16 %v554, %v550
    %v643 = vpack.c.b16 %v559, %v555
    %v644 = vpack.c.b16 %v560, %v556
    %v645 = vpack.c.b16 %v561, %v557
    %v646 = vpack.c.b16 %v562, %v558
    %v647 = vpack.c.b16 %v567, %v563
    %v648 = vpack.c.b16 %v568, %v564
    %v649 = vpack.c.b16 %v569, %v565
    %v650 = vpack.c.b16 %v570, %v566
    %v651 = vpack.c.b16 %v575, %v571
    %v652 = vpack.c.b16 %v576, %v572
    %v653 = vpack.c.b16 %v577, %v573
    %v654 = vpack.c.b16 %v578, %v574
    %v655 = vpack.c.b16 %v583, %v579
    %v656 = vpack.c.b16 %v584, %v580
    %v657 = vpack.c.b16 %v585, %v581
    %v658 = vpack.c.b16 %v586, %v582
    %v659 = vpack.c.b16 %v591, %v587
    %v660 = vpack.c.b16 %v592, %v588
    %v661 = vpack.c.b16 %v593, %v589
    %v662 = vpack.c.b16 %v594, %v590
    %v663 = vpack.c.b16 %v599, %v595
    %v664 = vpack.c.b16 %v600, %v596
    %v665 = vpack.c.b16 %v601, %v597
    %v666 = vpack.c.b16 %v602, %v598
    %731 = vmatprep.subr.bf16.mxu0 %v632
    %732 = vmatpush1.bf16.msra.mxu0 %v631
    %733 = vmatprep.subr.bf16.mxu0 %v628
    %734 = vmatpush1.bf16.msra.mxu0 %v627
    %735 = vmatprep.subr.bf16.mxu0 %v624
    %736 = vmatpush1.bf16.msra.mxu0 %v623
    %737 = vmatprep.subr.bf16.mxu0 %v620
    %738 = vmatpush1.bf16.msra.mxu0 %v619
    %739 = vmatprep.subr.bf16.mxu0 %v616
    %740 = vmatpush1.bf16.msra.mxu0 %v615
    %741 = vmatprep.subr.bf16.mxu0 %v612
    %742 = vmatpush1.bf16.msra.mxu0 %v611
    %743 = vmatprep.subr.bf16.mxu0 %v608
    %744 = vmatpush1.bf16.msra.mxu0 %v607
    %745 = vmatprep.subr.bf16.mxu0 %v604
    %746 = vmatpush1.bf16.msra.mxu0 %v603
    %747 = vmatprep.subr.bf16.mxu0 %v664
    %748 = vmatpush2.bf16.msra.mxu0 %v663
    %749 = vmatprep.subr.bf16.mxu0 %v660
    %750 = vmatpush2.bf16.msra.mxu0 %v659
    %751 = vmatprep.subr.bf16.mxu0 %v656
    %752 = vmatpush2.bf16.msra.mxu0 %v655
    %753 = vmatprep.subr.bf16.mxu0 %v652
    %754 = vmatpush2.bf16.msra.mxu0 %v651
    %755 = vmatprep.subr.bf16.mxu0 %v648
    %756 = vmatpush2.bf16.msra.mxu0 %v647
    %757 = vmatprep.subr.bf16.mxu0 %v644
    %758 = vmatpush2.bf16.msra.mxu0 %v643
    %759 = vmatprep.subr.bf16.mxu0 %v640
    %760 = vmatpush2.bf16.msra.mxu0 %v639
    %761 = vmatprep.subr.bf16.mxu0 %v636
    %762 = vmatpush2.bf16.msra.mxu0 %v635
    %763 = vmatprep.mubr.bf16.mxu0 %v389
    %764 = vmatmul.mubr.bf16.gmra.mxu0 %v388
    %v765 = vpop.f32.mrf.mxu0
    %v766 = vadd.f32 %v394, %v765
    %v767 = vpop.f32.mrf.mxu0
    %v768 = vadd.f32 %v398, %v767
    %v769 = vpop.f32.mrf.mxu0
    %v770 = vpop.f32.mrf.mxu0
    %771 = vdwg.mxu0
    %772 = vmatprep.subr.bf16.mxu0 %v634
    %773 = vmatpush1.bf16.msra.mxu0 %v633
    %774 = vmatprep.subr.bf16.mxu0 %v630
    %775 = vmatpush1.bf16.msra.mxu0 %v629
    %776 = vmatprep.subr.bf16.mxu0 %v626
    %777 = vmatpush1.bf16.msra.mxu0 %v625
    %778 = vmatprep.subr.bf16.mxu0 %v622
    %779 = vmatpush1.bf16.msra.mxu0 %v621
    %780 = vmatprep.subr.bf16.mxu0 %v618
    %781 = vmatpush1.bf16.msra.mxu0 %v617
    %782 = vmatprep.subr.bf16.mxu0 %v614
    %783 = vmatpush1.bf16.msra.mxu0 %v613
    %784 = vmatprep.subr.bf16.mxu0 %v610
    %785 = vmatpush1.bf16.msra.mxu0 %v609
    %786 = vmatprep.subr.bf16.mxu0 %v606
    %787 = vmatpush1.bf16.msra.mxu0 %v605
    %788 = vmatprep.subr.bf16.mxu0 %v666
    %789 = vmatpush2.bf16.msra.mxu0 %v665
    %790 = vmatprep.subr.bf16.mxu0 %v662
    %791 = vmatpush2.bf16.msra.mxu0 %v661
    %792 = vmatprep.subr.bf16.mxu0 %v658
    %793 = vmatpush2.bf16.msra.mxu0 %v657
    %794 = vmatprep.subr.bf16.mxu0 %v654
    %795 = vmatpush2.bf16.msra.mxu0 %v653
    %796 = vmatprep.subr.bf16.mxu0 %v650
    %797 = vmatpush2.bf16.msra.mxu0 %v649
    %798 = vmatprep.subr.bf16.mxu0 %v646
    %799 = vmatpush2.bf16.msra.mxu0 %v645
    %800 = vmatprep.subr.bf16.mxu0 %v642
    %801 = vmatpush2.bf16.msra.mxu0 %v641
    %802 = vmatprep.subr.bf16.mxu0 %v638
    %803 = vmatpush2.bf16.msra.mxu0 %v637
    %804 = vmatprep.mubr.bf16.mxu0 %v389
    %805 = vmatmul.mubr.bf16.gmra.mxu0 %v388
    %v806 = vpop.f32.mrf.mxu0
    %v807 = vadd.f32 %v402, %v806
    %v808 = vpop.f32.mrf.mxu0
    %v809 = vadd.f32 %v406, %v808
    %v810 = vpop.f32.mrf.mxu0
    %v811 = vpop.f32.mrf.mxu0
    %812 = vdwg.mxu0
    %v813 = vsub.f32 %v766, %v807
    %v814 = vsub.f32 %v768, %v809
    %v815 = vmul.f32 %v813, %v813
    %v816 = vmul.f32 %v814, %v814
    %v817 = vpack.c.bf16 %v815, %v815
    %v818 = vpack.c.bf16 %v816, %v816
    %v851 = vunpack.c.l.b16 %v183
    %v852 = vunpack.c.h.b16 %v183
    %v853 = vunpack.c.l.b16 %v184
    %v854 = vunpack.c.h.b16 %v184
    %v855 = vunpack.c.l.b16 %v185
    %v856 = vunpack.c.h.b16 %v185
    %v857 = vunpack.c.l.b16 %v186
    %v858 = vunpack.c.h.b16 %v186
    %v859 = vunpack.c.l.b16 %v187
    %v860 = vunpack.c.h.b16 %v187
    %v861 = vunpack.c.l.b16 %v188
    %v862 = vunpack.c.h.b16 %v188
    %v863 = vunpack.c.l.b16 %v189
    %v864 = vunpack.c.h.b16 %v189
    %v865 = vunpack.c.l.b16 %v190
    %v866 = vunpack.c.h.b16 %v190
    %v867 = vunpack.c.l.b16 %v191
    %v868 = vunpack.c.h.b16 %v191
    %v869 = vunpack.c.l.b16 %v192
    %v870 = vunpack.c.h.b16 %v192
    %v871 = vunpack.c.l.b16 %v193
    %v872 = vunpack.c.h.b16 %v193
    %v873 = vunpack.c.l.b16 %v194
    %v874 = vunpack.c.h.b16 %v194
    %v875 = vunpack.c.l.b16 %v195
    %v876 = vunpack.c.h.b16 %v195
    %v877 = vunpack.c.l.b16 %v196
    %v878 = vunpack.c.h.b16 %v196
    %v879 = vunpack.c.l.b16 %v197
    %v880 = vunpack.c.h.b16 %v197
    %v881 = vunpack.c.l.b16 %v198
    %v882 = vunpack.c.h.b16 %v198
    %v883 = vunpack.c.l.b16 %v199
    %v884 = vunpack.c.h.b16 %v199
    %v885 = vunpack.c.l.b16 %v200
    %v886 = vunpack.c.h.b16 %v200
    %v887 = vunpack.c.l.b16 %v201
    %v888 = vunpack.c.h.b16 %v201
    %v889 = vunpack.c.l.b16 %v202
    %v890 = vunpack.c.h.b16 %v202
    %v891 = vunpack.c.l.b16 %v203
    %v892 = vunpack.c.h.b16 %v203
    %v893 = vunpack.c.l.b16 %v204
    %v894 = vunpack.c.h.b16 %v204
    %v895 = vunpack.c.l.b16 %v205
    %v896 = vunpack.c.h.b16 %v205
    %v897 = vunpack.c.l.b16 %v206
    %v898 = vunpack.c.h.b16 %v206
    %v899 = vunpack.c.l.b16 %v207
    %v900 = vunpack.c.h.b16 %v207
    %v901 = vunpack.c.l.b16 %v208
    %v902 = vunpack.c.h.b16 %v208
    %v903 = vunpack.c.l.b16 %v209
    %v904 = vunpack.c.h.b16 %v209
    %v905 = vunpack.c.l.b16 %v210
    %v906 = vunpack.c.h.b16 %v210
    %v907 = vunpack.c.l.b16 %v211
    %v908 = vunpack.c.h.b16 %v211
    %v909 = vunpack.c.l.b16 %v212
    %v910 = vunpack.c.h.b16 %v212
    %v911 = vunpack.c.l.b16 %v213
    %v912 = vunpack.c.h.b16 %v213
    %v913 = vunpack.c.l.b16 %v214
    %v914 = vunpack.c.h.b16 %v214
    %v915 = vpack.c.b16 %v853, %v851
    %v916 = vpack.c.b16 %v854, %v852
    %v917 = vpack.c.b16 %v857, %v855
    %v918 = vpack.c.b16 %v858, %v856
    %v919 = vpack.c.b16 %v861, %v859
    %v920 = vpack.c.b16 %v862, %v860
    %v921 = vpack.c.b16 %v865, %v863
    %v922 = vpack.c.b16 %v866, %v864
    %v923 = vpack.c.b16 %v869, %v867
    %v924 = vpack.c.b16 %v870, %v868
    %v925 = vpack.c.b16 %v873, %v871
    %v926 = vpack.c.b16 %v874, %v872
    %v927 = vpack.c.b16 %v877, %v875
    %v928 = vpack.c.b16 %v878, %v876
    %v929 = vpack.c.b16 %v881, %v879
    %v930 = vpack.c.b16 %v882, %v880
    %v931 = vpack.c.b16 %v885, %v883
    %v932 = vpack.c.b16 %v886, %v884
    %v933 = vpack.c.b16 %v889, %v887
    %v934 = vpack.c.b16 %v890, %v888
    %v935 = vpack.c.b16 %v893, %v891
    %v936 = vpack.c.b16 %v894, %v892
    %v937 = vpack.c.b16 %v897, %v895
    %v938 = vpack.c.b16 %v898, %v896
    %v939 = vpack.c.b16 %v901, %v899
    %v940 = vpack.c.b16 %v902, %v900
    %v941 = vpack.c.b16 %v905, %v903
    %v942 = vpack.c.b16 %v906, %v904
    %v943 = vpack.c.b16 %v909, %v907
    %v944 = vpack.c.b16 %v910, %v908
    %v945 = vpack.c.b16 %v913, %v911
    %v946 = vpack.c.b16 %v914, %v912
    %979 = vmatprep.subr.bf16.mxu0 %v930
    %980 = vmatpush1.bf16.msra.mxu0 %v929
    %981 = vmatprep.subr.bf16.mxu0 %v928
    %982 = vmatpush1.bf16.msra.mxu0 %v927
    %983 = vmatprep.subr.bf16.mxu0 %v926
    %984 = vmatpush1.bf16.msra.mxu0 %v925
    %985 = vmatprep.subr.bf16.mxu0 %v924
    %986 = vmatpush1.bf16.msra.mxu0 %v923
    %987 = vmatprep.subr.bf16.mxu0 %v922
    %988 = vmatpush1.bf16.msra.mxu0 %v921
    %989 = vmatprep.subr.bf16.mxu0 %v920
    %990 = vmatpush1.bf16.msra.mxu0 %v919
    %991 = vmatprep.subr.bf16.mxu0 %v918
    %992 = vmatpush1.bf16.msra.mxu0 %v917
    %993 = vmatprep.subr.bf16.mxu0 %v916
    %994 = vmatpush1.bf16.msra.mxu0 %v915
    %995 = vmatprep.subr.bf16.mxu0 %v946
    %996 = vmatpush2.bf16.msra.mxu0 %v945
    %997 = vmatprep.subr.bf16.mxu0 %v944
    %998 = vmatpush2.bf16.msra.mxu0 %v943
    %999 = vmatprep.subr.bf16.mxu0 %v942
    %1000 = vmatpush2.bf16.msra.mxu0 %v941
    %1001 = vmatprep.subr.bf16.mxu0 %v940
    %1002 = vmatpush2.bf16.msra.mxu0 %v939
    %1003 = vmatprep.subr.bf16.mxu0 %v938
    %1004 = vmatpush2.bf16.msra.mxu0 %v937
    %1005 = vmatprep.subr.bf16.mxu0 %v936
    %1006 = vmatpush2.bf16.msra.mxu0 %v935
    %1007 = vmatprep.subr.bf16.mxu0 %v934
    %1008 = vmatpush2.bf16.msra.mxu0 %v933
    %1009 = vmatprep.subr.bf16.mxu0 %v932
    %1010 = vmatpush2.bf16.msra.mxu0 %v931
    %1011 = vmatprep.mubr.bf16.mxu0 %v818
    %1012 = vmatmul.mubr.bf16.gmra.mxu0 %v817
    %v1013 = vpop.f32.mrf.mxu0
    %v1014 = vadd.f32 1e-05, %v1013
    %v1015 = vpop.f32.mrf.mxu0
    %v1016 = vadd.f32 1e-05, %v1015
    %v1017 = vpop.f32.mrf.mxu0
    %v1018 = vpop.f32.mrf.mxu0
    %1019 = vdwg.mxu0
    %v1020 = vrsqrt.pop %v1014
    %v1021 = vrsqrt.pop %v1016
    %v1022 = vmul.f32 %v813, %v1020
    %v1023 = vmul.f32 %v814, %v1021
    %v1025 = vlaneseq
    %v1026 = vshrl.u32 %v1025, 7
    %v1027 = vsub.s32 0, %v1026
    %v1028 = vrot.slane %v251, %v1027
    %v1029 = vlaneseq
    %v1030 = vshrl.u32 %v1029, 7
    %v1031 = vsub.s32 1, %v1030
    %v1032 = vrot.slane %v251, %v1031
    %v1035 = vmul.f32 %v1022, %v1028
    %v1036 = vmul.f32 %v1023, %v1032
    %v1038 = vlaneseq
    %v1039 = vshrl.u32 %v1038, 7
    %v1040 = vsub.s32 0, %v1039
    %v1041 = vrot.slane %v253, %v1040
    %v1042 = vlaneseq
    %v1043 = vshrl.u32 %v1042, 7
    %v1044 = vsub.s32 1, %v1043
    %v1045 = vrot.slane %v253, %v1044
    %v1048 = vadd.f32 %v1035, %v1041
    %v1049 = vadd.f32 %v1036, %v1045
    %v1050 = vmax.f32 %v1048, 0.0
    %v1051 = vmax.f32 %v1049, 0.0
    %v1052 = vadd.f32 %v382, %v1050
    %v1053 = vadd.f32 %v384, %v1051
    %v1054 = vpack.c.bf16 %v1052, %v1052
    %v1055 = vpack.c.bf16 %v1053, %v1053
    %1056 = vmatprep.subr.bf16.mxu0 %v632
    %1057 = vmatpush1.bf16.msra.mxu0 %v631
    %1058 = vmatprep.subr.bf16.mxu0 %v628
    %1059 = vmatpush1.bf16.msra.mxu0 %v627
    %1060 = vmatprep.subr.bf16.mxu0 %v624
    %1061 = vmatpush1.bf16.msra.mxu0 %v623
    %1062 = vmatprep.subr.bf16.mxu0 %v620
    %1063 = vmatpush1.bf16.msra.mxu0 %v619
    %1064 = vmatprep.subr.bf16.mxu0 %v616
    %1065 = vmatpush1.bf16.msra.mxu0 %v615
    %1066 = vmatprep.subr.bf16.mxu0 %v612
    %1067 = vmatpush1.bf16.msra.mxu0 %v611
    %1068 = vmatprep.subr.bf16.mxu0 %v608
    %1069 = vmatpush1.bf16.msra.mxu0 %v607
    %1070 = vmatprep.subr.bf16.mxu0 %v604
    %1071 = vmatpush1.bf16.msra.mxu0 %v603
    %1072 = vmatprep.subr.bf16.mxu0 %v664
    %1073 = vmatpush2.bf16.msra.mxu0 %v663
    %1074 = vmatprep.subr.bf16.mxu0 %v660
    %1075 = vmatpush2.bf16.msra.mxu0 %v659
    %1076 = vmatprep.subr.bf16.mxu0 %v656
    %1077 = vmatpush2.bf16.msra.mxu0 %v655
    %1078 = vmatprep.subr.bf16.mxu0 %v652
    %1079 = vmatpush2.bf16.msra.mxu0 %v651
    %1080 = vmatprep.subr.bf16.mxu0 %v648
    %1081 = vmatpush2.bf16.msra.mxu0 %v647
    %1082 = vmatprep.subr.bf16.mxu0 %v644
    %1083 = vmatpush2.bf16.msra.mxu0 %v643
    %1084 = vmatprep.subr.bf16.mxu0 %v640
    %1085 = vmatpush2.bf16.msra.mxu0 %v639
    %1086 = vmatprep.subr.bf16.mxu0 %v636
    %1087 = vmatpush2.bf16.msra.mxu0 %v635
    %1088 = vmatprep.mubr.bf16.mxu0 %v1055
    %1089 = vmatmul.mubr.bf16.gmra.mxu0 %v1054
    %v1090 = vpop.f32.mrf.mxu0
    %v1091 = vadd.f32 %v394, %v1090
    %v1092 = vpop.f32.mrf.mxu0
    %v1093 = vadd.f32 %v398, %v1092
    %v1094 = vpop.f32.mrf.mxu0
    %v1095 = vpop.f32.mrf.mxu0
    %1096 = vdwg.mxu0
    %1097 = vmatprep.subr.bf16.mxu0 %v634
    %1098 = vmatpush1.bf16.msra.mxu0 %v633
    %1099 = vmatprep.subr.bf16.mxu0 %v630
    %1100 = vmatpush1.bf16.msra.mxu0 %v629
    %1101 = vmatprep.subr.bf16.mxu0 %v626
    %1102 = vmatpush1.bf16.msra.mxu0 %v625
    %1103 = vmatprep.subr.bf16.mxu0 %v622
    %1104 = vmatpush1.bf16.msra.mxu0 %v621
    %1105 = vmatprep.subr.bf16.mxu0 %v618
    %1106 = vmatpush1.bf16.msra.mxu0 %v617
    %1107 = vmatprep.subr.bf16.mxu0 %v614
    %1108 = vmatpush1.bf16.msra.mxu0 %v613
    %1109 = vmatprep.subr.bf16.mxu0 %v610
    %1110 = vmatpush1.bf16.msra.mxu0 %v609
    %1111 = vmatprep.subr.bf16.mxu0 %v606
    %1112 = vmatpush1.bf16.msra.mxu0 %v605
    %1113 = vmatprep.subr.bf16.mxu0 %v666
    %1114 = vmatpush2.bf16.msra.mxu0 %v665
    %1115 = vmatprep.subr.bf16.mxu0 %v662
    %1116 = vmatpush2.bf16.msra.mxu0 %v661
    %1117 = vmatprep.subr.bf16.mxu0 %v658
    %1118 = vmatpush2.bf16.msra.mxu0 %v657
    %1119 = vmatprep.subr.bf16.mxu0 %v654
    %1120 = vmatpush2.bf16.msra.mxu0 %v653
    %1121 = vmatprep.subr.bf16.mxu0 %v650
    %1122 = vmatpush2.bf16.msra.mxu0 %v649
    %1123 = vmatprep.subr.bf16.mxu0 %v646
    %1124 = vmatpush2.bf16.msra.mxu0 %v645
    %1125 = vmatprep.subr.bf16.mxu0 %v642
    %1126 = vmatpush2.bf16.msra.mxu0 %v641
    %1127 = vmatprep.subr.bf16.mxu0 %v638
    %1128 = vmatpush2.bf16.msra.mxu0 %v637
    %1129 = vmatprep.mubr.bf16.mxu0 %v1055
    %1130 = vmatmul.mubr.bf16.gmra.mxu0 %v1054
    %v1131 = vpop.f32.mrf.mxu0
    %v1132 = vadd.f32 %v402, %v1131
    %v1133 = vpop.f32.mrf.mxu0
    %v1134 = vadd.f32 %v406, %v1133
    %v1135 = vpop.f32.mrf.mxu0
    %v1136 = vpop.f32.mrf.mxu0
    %1137 = vdwg.mxu0
    %v1138 = vsub.f32 %v1091, %v1132
    %v1139 = vsub.f32 %v1093, %v1134
    %v1140 = vmul.f32 %v1138, %v1138
    %v1141 = vmul.f32 %v1139, %v1139
    %v1142 = vpack.c.bf16 %v1140, %v1140
    %v1143 = vpack.c.bf16 %v1141, %v1141
    %1144 = vmatprep.subr.bf16.mxu0 %v930
    %1145 = vmatpush1.bf16.msra.mxu0 %v929
    %1146 = vmatprep.subr.bf16.mxu0 %v928
    %1147 = vmatpush1.bf16.msra.mxu0 %v927
    %1148 = vmatprep.subr.bf16.mxu0 %v926
    %1149 = vmatpush1.bf16.msra.mxu0 %v925
    %1150 = vmatprep.subr.bf16.mxu0 %v924
    %1151 = vmatpush1.bf16.msra.mxu0 %v923
    %1152 = vmatprep.subr.bf16.mxu0 %v922
    %1153 = vmatpush1.bf16.msra.mxu0 %v921
    %1154 = vmatprep.subr.bf16.mxu0 %v920
    %1155 = vmatpush1.bf16.msra.mxu0 %v919
    %1156 = vmatprep.subr.bf16.mxu0 %v918
    %1157 = vmatpush1.bf16.msra.mxu0 %v917
    %1158 = vmatprep.subr.bf16.mxu0 %v916
    %1159 = vmatpush1.bf16.msra.mxu0 %v915
    %1160 = vmatprep.subr.bf16.mxu0 %v946
    %1161 = vmatpush2.bf16.msra.mxu0 %v945
    %1162 = vmatprep.subr.bf16.mxu0 %v944
    %1163 = vmatpush2.bf16.msra.mxu0 %v943
    %1164 = vmatprep.subr.bf16.mxu0 %v942
    %1165 = vmatpush2.bf16.msra.mxu0 %v941
    %1166 = vmatprep.subr.bf16.mxu0 %v940
    %1167 = vmatpush2.bf16.msra.mxu0 %v939
    %1168 = vmatprep.subr.bf16.mxu0 %v938
    %1169 = vmatpush2.bf16.msra.mxu0 %v937
    %1170 = vmatprep.subr.bf16.mxu0 %v936
    %1171 = vmatpush2.bf16.msra.mxu0 %v935
    %1172 = vmatprep.subr.bf16.mxu0 %v934
    %1173 = vmatpush2.bf16.msra.mxu0 %v933
    %1174 = vmatprep.subr.bf16.mxu0 %v932
    %1175 = vmatpush2.bf16.msra.mxu0 %v931
    %1176 = vmatprep.mubr.bf16.mxu0 %v1143
    %1177 = vmatmul.mubr.bf16.gmra.mxu0 %v1142
    %v1178 = vpop.f32.mrf.mxu0
    %v1179 = vadd.f32 1e-05, %v1178
    %v1180 = vpop.f32.mrf.mxu0
    %v1181 = vadd.f32 1e-05, %v1180
    %v1182 = vpop.f32.mrf.mxu0
    %v1183 = vpop.f32.mrf.mxu0
    %1184 = vdwg.mxu0
    %v1185 = vrsqrt.pop %v1179
    %v1186 = vrsqrt.pop %v1181
    %v1187 = vmul.f32 %v1138, %v1185
    %v1188 = vmul.f32 %v1139, %v1186
    %v1189 = vmul.f32 %v1187, %v1028
    %v1190 = vmul.f32 %v1188, %v1032
    %v1191 = vadd.f32 %v1189, %v1041
    %v1192 = vadd.f32 %v1190, %v1045
    %v1193 = vmax.f32 %v1191, 0.0
    %v1194 = vmax.f32 %v1192, 0.0
    %v1195 = vadd.f32 %v1052, %v1193
    %v1196 = vadd.f32 %v1053, %v1194
    %v1197 = vpack.c.bf16 %v1195, %v1195
    %v1198 = vpack.c.bf16 %v1196, %v1196
    %v1231 = vunpack.c.l.b16 %v215
    %v1232 = vunpack.c.l.b16 %v216
    %v1233 = vunpack.c.l.b16 %v217
    %v1234 = vunpack.c.l.b16 %v218
    %v1235 = vunpack.c.l.b16 %v219
    %v1236 = vunpack.c.l.b16 %v220
    %v1237 = vunpack.c.l.b16 %v221
    %v1238 = vunpack.c.l.b16 %v222
    %v1239 = vunpack.c.l.b16 %v223
    %v1240 = vunpack.c.l.b16 %v224
    %v1241 = vunpack.c.l.b16 %v225
    %v1242 = vunpack.c.l.b16 %v226
    %v1243 = vunpack.c.l.b16 %v227
    %v1244 = vunpack.c.l.b16 %v228
    %v1245 = vunpack.c.l.b16 %v229
    %v1246 = vunpack.c.l.b16 %v230
    %v1247 = vunpack.c.l.b16 %v231
    %v1248 = vunpack.c.l.b16 %v232
    %v1249 = vunpack.c.l.b16 %v233
    %v1250 = vunpack.c.l.b16 %v234
    %v1251 = vunpack.c.l.b16 %v235
    %v1252 = vunpack.c.l.b16 %v236
    %v1253 = vunpack.c.l.b16 %v237
    %v1254 = vunpack.c.l.b16 %v238
    %v1255 = vunpack.c.l.b16 %v239
    %v1256 = vunpack.c.l.b16 %v240
    %v1257 = vunpack.c.l.b16 %v241
    %v1258 = vunpack.c.l.b16 %v242
    %v1259 = vunpack.c.l.b16 %v243
    %v1260 = vunpack.c.l.b16 %v244
    %v1261 = vunpack.c.l.b16 %v245
    %v1262 = vunpack.c.l.b16 %v246
    %v1263 = vpack.c.b16 %v1232, %v1231
    %v1264 = vpack.c.b16 %v1234, %v1233
    %v1265 = vpack.c.b16 %v1236, %v1235
    %v1266 = vpack.c.b16 %v1238, %v1237
    %v1267 = vpack.c.b16 %v1240, %v1239
    %v1268 = vpack.c.b16 %v1242, %v1241
    %v1269 = vpack.c.b16 %v1244, %v1243
    %v1270 = vpack.c.b16 %v1246, %v1245
    %v1271 = vpack.c.b16 %v1248, %v1247
    %v1272 = vpack.c.b16 %v1250, %v1249
    %v1273 = vpack.c.b16 %v1252, %v1251
    %v1274 = vpack.c.b16 %v1254, %v1253
    %v1275 = vpack.c.b16 %v1256, %v1255
    %v1276 = vpack.c.b16 %v1258, %v1257
    %v1277 = vpack.c.b16 %v1260, %v1259
    %v1278 = vpack.c.b16 %v1262, %v1261
    %1295 = vmatprep.subr.bf16.mxu0 0
    %1296 = vmatpush1.bf16.msra.mxu0 %v1270
    %1297 = vmatprep.subr.bf16.mxu0 0
    %1298 = vmatpush1.bf16.msra.mxu0 %v1269
    %1299 = vmatprep.subr.bf16.mxu0 0
    %1300 = vmatpush1.bf16.msra.mxu0 %v1268
    %1301 = vmatprep.subr.bf16.mxu0 0
    %1302 = vmatpush1.bf16.msra.mxu0 %v1267
    %1303 = vmatprep.subr.bf16.mxu0 0
    %1304 = vmatpush1.bf16.msra.mxu0 %v1266
    %1305 = vmatprep.subr.bf16.mxu0 0
    %1306 = vmatpush1.bf16.msra.mxu0 %v1265
    %1307 = vmatprep.subr.bf16.mxu0 0
    %1308 = vmatpush1.bf16.msra.mxu0 %v1264
    %1309 = vmatprep.subr.bf16.mxu0 0
    %1310 = vmatpush1.bf16.msra.mxu0 %v1263
    %1311 = vmatprep.subr.bf16.mxu0 0
    %1312 = vmatpush2.bf16.msra.mxu0 %v1278
    %1313 = vmatprep.subr.bf16.mxu0 0
    %1314 = vmatpush2.bf16.msra.mxu0 %v1277
    %1315 = vmatprep.subr.bf16.mxu0 0
    %1316 = vmatpush2.bf16.msra.mxu0 %v1276
    %1317 = vmatprep.subr.bf16.mxu0 0
    %1318 = vmatpush2.bf16.msra.mxu0 %v1275
    %1319 = vmatprep.subr.bf16.mxu0 0
    %1320 = vmatpush2.bf16.msra.mxu0 %v1274
    %1321 = vmatprep.subr.bf16.mxu0 0
    %1322 = vmatpush2.bf16.msra.mxu0 %v1273
    %1323 = vmatprep.subr.bf16.mxu0 0
    %1324 = vmatpush2.bf16.msra.mxu0 %v1272
    %1325 = vmatprep.subr.bf16.mxu0 0
    %1326 = vmatpush2.bf16.msra.mxu0 %v1271
    %1327 = vmatprep.mubr.bf16.mxu0 %v1198
    %1328 = vmatmul.mubr.bf16.gmra.mxu0 %v1197
    %v1329 = vpop.f32.mrf.mxu0
    %v1330 = vadd.f32 %v254, %v1329
    %v1331 = vpop.f32.mrf.mxu0
    %v1332 = vpop.f32.mrf.mxu0
    %v1333 = vpop.f32.mrf.mxu0
    %1334 = vdwg.mxu0
    %1335 = vst [vmem:[#allocation13] sm:$0x3] %v1330
    // Predicated region
    $region50: #{tpu_custom_call.1} parent=1 // pred_check
      _
    $region51: #{tpu_custom_call.1} parent=1 // pred_check_branch
      %1337 = sbr.rel (0) target = $region53
    $region52: #{tpu_custom_call.1} parent=1 // pred_region
      %s1339 = ssub.s32 32, 32
      %1340 = vsyncadd [#allocation4], %s1339
      %s1342 = sshll.u32 [#allocation13], 4
      %s1343 = int_to_ptr.vmem [resolvable:$true] %s1342
      %1345 = dma.vmem_to_hbm [thread:$0]  %s1343, 32, %s6, [#allocation4]
    $region53: #{tpu_custom_call.1} parent=1 // pred_fallthru
      _
    // Predicated region
    $region54: #{tpu_custom_call.1} parent=1 // pred_check
      _
    $region55: #{tpu_custom_call.1} parent=1 // pred_check_branch
      %1347 = sbr.rel (0) target = $region57
    $region56: #{tpu_custom_call.1} parent=1 // pred_region
      %1348 = dma.done [#allocation4], 32
    $region57: #{tpu_custom_call.1} parent=1 // pred_fallthru
      _
    %1349 = vsyncpa [#allocation3], 1
    %1350 = vsyncpa [#allocation6], 1
    %1351 = vsyncpa [#allocation9], 1
    %1352 = vsyncpa [#allocation12], 1
    %1353 = vsyncpa [#allocation4], 1

</llo_original>
